<compile_context>
chip_gen: v7x
topology: tpu7x:2x2x1
jax: 0.10.0
libtpu: 0.0.40
codegen_flags: <defaults>
</compile_context>

<pallas_src>
import functools

import numpy as np
import jax
import jax.numpy as jnp
from jax import lax
from jax.experimental import pallas as pl
from jax.experimental.pallas import tpu as pltpu


# ---------------------------------------------------------------------------
# Deterministic parameter construction (mirrors STFT.__init__; no checkpoint).
# ---------------------------------------------------------------------------
def _hann_periodic(win_length: int) -> np.ndarray:
    n = np.arange(win_length)
    return 0.5 - 0.5 * np.cos(2.0 * np.pi * n / win_length)


def _pad_center(w: np.ndarray, size: int) -> np.ndarray:
    lpad = (size - len(w)) // 2
    rpad = size - len(w) - lpad
    return np.pad(w, (lpad, rpad))


def _window_sumsquare(n_frames, hop_length, win_length, n_fft) -> np.ndarray:
    n = n_fft + hop_length * (n_frames - 1)
    x = np.zeros(n, dtype=np.float32)
    win_sq = _hann_periodic(win_length) ** 2
    win_sq = _pad_center(win_sq, n_fft)
    for i in range(n_frames):
        s = i * hop_length
        x[s:min(n, s + n_fft)] += win_sq[: max(0, min(n_fft, n - s))]
    return x


def build_istft_params(max_frames, filter_length, hop_length, win_length):
    scale = filter_length / hop_length
    fourier_basis = np.fft.fft(np.eye(filter_length))
    cutoff = int(filter_length / 2 + 1)
    fourier_basis = np.vstack(
        [np.real(fourier_basis[:cutoff, :]), np.imag(fourier_basis[:cutoff, :])]
    )
    inverse_basis = np.linalg.pinv(scale * fourier_basis).T  # (2*cutoff, filter_length)
    fft_window = _pad_center(_hann_periodic(win_length), filter_length)
    inverse_basis = (inverse_basis * fft_window[None, :]).astype(np.float32)
    window_sum = _window_sumsquare(max_frames, hop_length, win_length, filter_length)
    tiny = float(np.finfo(np.float32).tiny)
    return inverse_basis, window_sum, tiny


# ---------------------------------------------------------------------------
# Pallas kernel: phase recombination + fused MXU matmul + fold overlap-add with
# cross-step carry + precomputed 1/window_sum normalization, all fused.
# ---------------------------------------------------------------------------
def _istft_kernel(mag_ref, x_ref, y_ref, basis_ref, invw_ref, out_ref,
                  lhs_ref, acc_ref, *, n_h, n_h_align, hop, n_taps):
    i = pl.program_id(0)
    t_tile = out_ref.shape[0]  # frames per grid step (== output chunks emitted per step)

    @pl.when(i == 0)
    def _init():
        # zero LHS once (its padding rows stay zero forever) and the OLA accumulator.
        lhs_ref[...] = jnp.zeros_like(lhs_ref)
        acc_ref[...] = jnp.zeros_like(acc_ref)

    # --- phase recombination:  real = mag*cos(atan2(y,x)), imag = mag*sin(atan2(y,x))
    # computed as mag*x/|z|, mag*y/|z| with the atan2(0,0)=0 convention handled by the
    # selects.  (Subnormal x,y whose squares underflow fall into the zero branch; the
    # numerical impact is negligible.)  One shared mag*rsqrt saves a mul + select; the
    # rsqrt goes to the EUP (free slot relative to the VALU work).
    mag = mag_ref[...]           # (Nh, tT)
    xr = x_ref[...]
    yr = y_ref[...]
    r2 = xr * xr + yr * yr
    nz = r2 > 0.0
    s = mag * lax.rsqrt(jnp.where(nz, r2, 1.0))
    lhs_ref[0:n_h, :] = jnp.where(nz, xr * s, mag)                       # real rows
    lhs_ref[n_h_align:n_h_align + n_h, :] = jnp.where(nz, yr * s, 0.0)   # imag rows

    # --- one fused MXU matmul: (Cpad, tT)^T @ (Cpad, K) -> (tT, K) frames.
    # The n_fft/hop scale is already folded into basis_ref on the host.
    frames = lax.dot_general(
        lhs_ref[...], basis_ref[...],
        dimension_numbers=(((0,), (0,)), ((), ())),
        preferred_element_type=jnp.float32,
    )  # (tT, K)

    # --- fold overlap-add: frame row t, slice r (hop samples) -> chunk row t + r.
    for r in range(n_taps):
        acc_ref[r:r + t_tile, :] += frames[:, r * hop:(r + 1) * hop]

    # --- the first t_tile chunk rows are final: normalize (precomputed 1/wsum) and emit.
    out_ref[...] = acc_ref[0:t_tile, :] * invw_ref[...]

    # --- carry the tail (chunks still receiving contributions from later frames).
    if n_taps > 1:
        carry = acc_ref[t_tile:t_tile + n_taps - 1, :]
        acc_ref[...] = jnp.zeros_like(acc_ref)
        acc_ref[0:n_taps - 1, :] = carry
    else:
        acc_ref[...] = jnp.zeros_like(acc_ref)


def istft_pallas(mag, x, y, *, n_fft, hop_length, win_length,
                 max_frames=5200, frame_tile=128):
    """mag, x, y: (B, Nh, T) float32 with B == 1. Returns (1, 1, (T-1)*hop)."""
    assert mag.ndim == 3 and mag.shape[0] == 1, "reference 'center' path only supports B=1"
    B, Nh, T = mag.shape
    assert Nh == n_fft // 2 + 1
    assert n_fft % hop_length == 0, "fold overlap-add requires hop | n_fft"
    assert T <= max_frames, "window_sum envelope only covers max_frames frames"

    hop = hop_length
    K = n_fft
    R = n_fft // hop                      # taps per output chunk
    L = (T - 1) * hop + K                 # untrimmed output length
    L_trim = L - n_fft

    # frame tile: multiple of 128 so the lane dim of the (Nh, tT) input blocks is aligned.
    tT = ((max(frame_tile, 128) + 127) // 128) * 128
    assert R <= tT
    n_chunks = T + R - 1                  # == L // hop
    T_pad = ((n_chunks + tT - 1) // tT) * tT
    nT = T_pad // tT

    inv_basis, window_sum, tiny = build_istft_params(max_frames, n_fft, hop, win_length)

    # --- host-side constant folding ---------------------------------------------------
    # fused + padded basis, pre-scaled by n_fft/hop. real rows at [0:Nh], imag rows at
    # [Nh_align:Nh_align+Nh] (8-aligned), total rows padded to a multiple of 128.
    Nh_align = ((Nh + 7) // 8) * 8
    Cpad = ((2 * Nh_align + 127) // 128) * 128
    scale = float(n_fft) / float(hop)
    basis_full = np.zeros((Cpad, K), np.float32)
    basis_full[0:Nh, :] = inv_basis[:Nh, :] * scale
    basis_full[Nh_align:Nh_align + Nh, :] = inv_basis[Nh:2 * Nh, :] * scale
    basis_full = jnp.asarray(basis_full)

    # precomputed 1/window_sum (guarded by tiny); chunk-row layout (T_pad, hop).
    ws = window_sum[:L]
    invw = np.ones(T_pad * hop, np.float32)
    invw[:L] = np.where(ws > tiny, 1.0 / np.where(ws > tiny, ws, 1.0), 1.0)
    invw = jnp.asarray(invw).reshape(T_pad, hop)

    # zero-pad the frame axis (zero frames contribute exactly zero downstream).
    pad_t = T_pad - T
    mag2 = jnp.pad(mag[0].astype(jnp.float32), ((0, 0), (0, pad_t)))
    x2 = jnp.pad(x[0].astype(jnp.float32), ((0, 0), (0, pad_t)))
    y2 = jnp.pad(y[0].astype(jnp.float32), ((0, 0), (0, pad_t)))

    kernel = functools.partial(_istft_kernel, n_h=Nh, n_h_align=Nh_align,
                               hop=hop, n_taps=R)

    out2d = pl.pallas_call(
        kernel,
        out_shape=jax.ShapeDtypeStruct((T_pad, hop), jnp.float32),
        grid_spec=pltpu.PrefetchScalarGridSpec(
            num_scalar_prefetch=0,
            grid=(nT,),
            in_specs=[
                pl.BlockSpec((Nh, tT), lambda i: (0, i)),      # mag
                pl.BlockSpec((Nh, tT), lambda i: (0, i)),      # x
                pl.BlockSpec((Nh, tT), lambda i: (0, i)),      # y
                pl.BlockSpec((Cpad, K), lambda i: (0, 0)),     # fused basis (resident)
                pl.BlockSpec((tT, hop), lambda i: (i, 0)),     # 1/window_sum chunks
            ],
            out_specs=pl.BlockSpec((tT, hop), lambda i: (i, 0)),
            scratch_shapes=[
                pltpu.VMEM((Cpad, tT), jnp.float32),           # [real ; imag] LHS
                pltpu.VMEM((tT + R - 1, hop), jnp.float32),    # OLA accumulator + carry
            ],
        ),
        compiler_params=pltpu.CompilerParams(
            dimension_semantics=("arbitrary",),                # carry => sequential
            vmem_limit_bytes=48 * 1024 * 1024,
        ),
    )(mag2, x2, y2, basis_full, invw)

    # center trim via a static slice of the flattened chunk slab.
    flat = out2d.reshape(1, T_pad * hop)
    half = n_fft // 2
    out = lax.slice(flat, (0, half), (1, half + L_trim))
    return out.reshape(1, 1, L_trim)


# ---------------------------------------------------------------------------
# Pure-numpy reference of the PyTorch 'center' path, used for validation.
# ---------------------------------------------------------------------------
def _reference_numpy(mag, x, y, inv_basis, window_sum_full, n_fft, hop, tiny):
    phase = np.arctan2(y, x)
    rec = np.concatenate([mag * np.cos(phase), mag * np.sin(phase)], axis=1)  # (1, C, T)
    B, C, T = rec.shape
    K = inv_basis.shape[1]
    L = (T - 1) * hop + K
    out = np.zeros((B, L), np.float32)
    for t in range(T):
        out[:, t * hop:t * hop + K] += rec[:, :, t] @ inv_basis
    ws = window_sum_full[:L]
    nzi = ws > tiny
    out[:, nzi] = out[:, nzi] / ws[nzi]
    out = out * (float(n_fft) / hop)
    return out[:, n_fft // 2: L - n_fft // 2]  # (1, L_trim)


if __name__ == "__main__":
    n_fft, hop_length, win_length = 16, 4, 16
    Nh = n_fft // 2 + 1
    inv_basis, window_sum_full, tiny = build_istft_params(5200, n_fft, hop_length, win_length)

    key = jax.random.PRNGKey(0)

    # test 1: tiny input (single grid step)  -- spectrogram (B, N, T) as in the module
    # test 2: larger frame count + tile=128 (exercises the multi-tile path + overlap carry)
    # test 3: same input with a larger frame tile (single-step path for big tiles)
    for T, tile in ((8, 128), (200, 128), (200, 256)):
        key, k1, k2, k3 = jax.random.split(key, 4)
        mag = jax.random.uniform(k1, (1, Nh, T), jnp.float32, minval=0.1, maxval=1.0)
        x = jax.random.normal(k2, (1, Nh, T), jnp.float32)
        y = jax.random.normal(k3, (1, Nh, T), jnp.float32)

        out = istft_pallas(mag, x, y, n_fft=n_fft, hop_length=hop_length,
                           win_length=win_length, frame_tile=tile)
        out = jax.block_until_ready(out)

        ref = _reference_numpy(np.asarray(mag), np.asarray(x), np.asarray(y),
                               inv_basis, window_sum_full, n_fft, hop_length, tiny)
        np.testing.assert_allclose(np.asarray(out)[0], ref, rtol=1e-4, atol=1e-4)

    print("KERNEL_OK")
</pallas_src>

<mosaic_0001>
module attributes {stable_mosaic.version = 11 : i64} {
  func.func @_istft_kernel(%arg0: i32, %arg1: memref<9x128xf32, #tpu.memory_space<vmem>>, %arg2: memref<9x128xf32, #tpu.memory_space<vmem>>, %arg3: memref<9x128xf32, #tpu.memory_space<vmem>>, %arg4: memref<128x16xf32, #tpu.memory_space<vmem>>, %arg5: memref<128x4xf32, #tpu.memory_space<vmem>>, %arg6: memref<128x4xf32, #tpu.memory_space<vmem>>, %arg7: memref<128x128xf32, #tpu.memory_space<vmem>>, %arg8: memref<131x4xf32, #tpu.memory_space<vmem>>) attributes {dimension_semantics = [#tpu.dimension_semantics<arbitrary>], iteration_bounds = array<i64: 1>, scalar_prefetch = 0 : i64, scratch_operands = 2 : i64, tpu.core_type = #tpu.core_type<tc>, window_params = [{transform_indices = @transform_0, window_bounds = array<i64: 9, 128>}, {transform_indices = @transform_1, window_bounds = array<i64: 9, 128>}, {transform_indices = @transform_2, window_bounds = array<i64: 9, 128>}, {pipeline_mode = #tpu.pipeline_mode<synchronous>, transform_indices = @transform_3, window_bounds = array<i64: 128, 16>}, {transform_indices = @transform_4, window_bounds = array<i64: 128, 4>}, {transform_indices = @transform_5, window_bounds = array<i64: 128, 4>}]} {
    %c0_i32 = arith.constant 0 : i32
    %0 = arith.cmpi eq, %arg0, %c0_i32 : i32
    %1 = arith.extui %0 : i1 to i32
    %c0_i32_0 = arith.constant 0 : i32
    %2 = arith.cmpi ne, %1, %c0_i32_0 : i32
    scf.if %2 {
      %cst_41 = arith.constant 0.000000e+00 : f32
      %49 = vector.broadcast %cst_41 : f32 to vector<128x128xf32>
      %c0_42 = arith.constant 0 : index
      %c0_43 = arith.constant 0 : index
      %50 = vector.load %arg7[%c0_42, %c0_43] : memref<128x128xf32, #tpu.memory_space<vmem>>, vector<128x128xf32>
      tpu.vector_store %arg7[%c0_42, %c0_43], %49 {strides = array<i32>} : memref<128x128xf32, #tpu.memory_space<vmem>>, vector<128x128xf32>,
      %cst_44 = arith.constant 0.000000e+00 : f32
      %51 = vector.broadcast %cst_44 : f32 to vector<131x4xf32>
      %c0_45 = arith.constant 0 : index
      %c0_46 = arith.constant 0 : index
      %52 = vector.load %arg8[%c0_45, %c0_46] : memref<131x4xf32, #tpu.memory_space<vmem>>, vector<131x4xf32>
      tpu.vector_store %arg8[%c0_45, %c0_46], %51 {strides = array<i32>} : memref<131x4xf32, #tpu.memory_space<vmem>>, vector<131x4xf32>,
    } else {
    }
    %c0 = arith.constant 0 : index
    %c0_1 = arith.constant 0 : index
    %3 = vector.load %arg1[%c0, %c0_1] : memref<9x128xf32, #tpu.memory_space<vmem>>, vector<9x128xf32>
    %c0_2 = arith.constant 0 : index
    %c0_3 = arith.constant 0 : index
    %4 = vector.load %arg2[%c0_2, %c0_3] : memref<9x128xf32, #tpu.memory_space<vmem>>, vector<9x128xf32>
    %c0_4 = arith.constant 0 : index
    %c0_5 = arith.constant 0 : index
    %5 = vector.load %arg3[%c0_4, %c0_5] : memref<9x128xf32, #tpu.memory_space<vmem>>, vector<9x128xf32>
    %6 = arith.mulf %4, %4 : vector<9x128xf32>
    %7 = arith.mulf %5, %5 : vector<9x128xf32>
    %8 = arith.addf %6, %7 : vector<9x128xf32>
    %cst = arith.constant 0.000000e+00 : f32
    %9 = vector.broadcast %cst : f32 to vector<9x128xf32>
    %10 = arith.cmpf ogt, %8, %9 : vector<9x128xf32>
    %cst_6 = arith.constant 1.000000e+00 : f32
    %11 = vector.broadcast %cst_6 : f32 to vector<9x128xf32>
    %12 = arith.select %10, %8, %11 : vector<9x128xi1>, vector<9x128xf32>
    %13 = math.rsqrt %12 : vector<9x128xf32>
    %14 = arith.mulf %3, %13 : vector<9x128xf32>
    %15 = arith.mulf %4, %14 : vector<9x128xf32>
    %16 = arith.select %10, %15, %3 : vector<9x128xi1>, vector<9x128xf32>
    %c0_7 = arith.constant 0 : index
    %c0_8 = arith.constant 0 : index
    %17 = vector.load %arg7[%c0_7, %c0_8] : memref<128x128xf32, #tpu.memory_space<vmem>>, vector<9x128xf32>
    tpu.vector_store %arg7[%c0_7, %c0_8], %16 {strides = array<i32>} : memref<128x128xf32, #tpu.memory_space<vmem>>, vector<9x128xf32>,
    %18 = arith.mulf %5, %14 : vector<9x128xf32>
    %cst_9 = arith.constant 0.000000e+00 : f32
    %19 = vector.broadcast %cst_9 : f32 to vector<9x128xf32>
    %20 = arith.select %10, %18, %19 : vector<9x128xi1>, vector<9x128xf32>
    %c16 = arith.constant 16 : index
    %c0_10 = arith.constant 0 : index
    %21 = vector.load %arg7[%c16, %c0_10] : memref<128x128xf32, #tpu.memory_space<vmem>>, vector<9x128xf32>
    tpu.vector_store %arg7[%c16, %c0_10], %20 {strides = array<i32>} : memref<128x128xf32, #tpu.memory_space<vmem>>, vector<9x128xf32>,
    %c0_11 = arith.constant 0 : index
    %c0_12 = arith.constant 0 : index
    %22 = vector.load %arg7[%c0_11, %c0_12] : memref<128x128xf32, #tpu.memory_space<vmem>>, vector<128x128xf32>
    %c0_13 = arith.constant 0 : index
    %c0_14 = arith.constant 0 : index
    %23 = vector.load %arg4[%c0_13, %c0_14] : memref<128x16xf32, #tpu.memory_space<vmem>>, vector<128x16xf32>
    %cst_15 = arith.constant dense<0.000000e+00> : vector<128x16xf32>
    %24 = tpu.matmul %22, %23, %cst_15 {dimension_numbers = #tpu.dot_dimension_numbers<[0], [0], [1], [1], [0, 1, 1, 1], [], []>} : vector<128x128xf32>, vector<128x16xf32>, vector<128x16xf32> -> vector<128x16xf32>
    %c0_16 = arith.constant 0 : index
    %c0_17 = arith.constant 0 : index
    %25 = vector.load %arg8[%c0_16, %c0_17] : memref<131x4xf32, #tpu.memory_space<vmem>>, vector<128x4xf32>
    %26 = vector.extract_strided_slice %24 {offsets = [0, 0], sizes = [128, 4], strides = [1, 1]} : vector<128x16xf32> to vector<128x4xf32>
    %27 = arith.addf %25, %26 : vector<128x4xf32>
    %c0_18 = arith.constant 0 : index
    %c0_19 = arith.constant 0 : index
    %28 = vector.load %arg8[%c0_18, %c0_19] : memref<131x4xf32, #tpu.memory_space<vmem>>, vector<128x4xf32>
    tpu.vector_store %arg8[%c0_18, %c0_19], %27 {strides = array<i32>} : memref<131x4xf32, #tpu.memory_space<vmem>>, vector<128x4xf32>,
    %c1 = arith.constant 1 : index
    %c0_20 = arith.constant 0 : index
    %29 = vector.load %arg8[%c1, %c0_20] : memref<131x4xf32, #tpu.memory_space<vmem>>, vector<128x4xf32>
    %30 = vector.extract_strided_slice %24 {offsets = [0, 4], sizes = [128, 4], strides = [1, 1]} : vector<128x16xf32> to vector<128x4xf32>
    %31 = arith.addf %29, %30 : vector<128x4xf32>
    %c1_21 = arith.constant 1 : index
    %c0_22 = arith.constant 0 : index
    %32 = vector.load %arg8[%c1_21, %c0_22] : memref<131x4xf32, #tpu.memory_space<vmem>>, vector<128x4xf32>
    tpu.vector_store %arg8[%c1_21, %c0_22], %31 {strides = array<i32>} : memref<131x4xf32, #tpu.memory_space<vmem>>, vector<128x4xf32>,
    %c2 = arith.constant 2 : index
    %c0_23 = arith.constant 0 : index
    %33 = vector.load %arg8[%c2, %c0_23] : memref<131x4xf32, #tpu.memory_space<vmem>>, vector<128x4xf32>
    %34 = vector.extract_strided_slice %24 {offsets = [0, 8], sizes = [128, 4], strides = [1, 1]} : vector<128x16xf32> to vector<128x4xf32>
    %35 = arith.addf %33, %34 : vector<128x4xf32>
    %c2_24 = arith.constant 2 : index
    %c0_25 = arith.constant 0 : index
    %36 = vector.load %arg8[%c2_24, %c0_25] : memref<131x4xf32, #tpu.memory_space<vmem>>, vector<128x4xf32>
    tpu.vector_store %arg8[%c2_24, %c0_25], %35 {strides = array<i32>} : memref<131x4xf32, #tpu.memory_space<vmem>>, vector<128x4xf32>,
    %c3 = arith.constant 3 : index
    %c0_26 = arith.constant 0 : index
    %37 = vector.load %arg8[%c3, %c0_26] : memref<131x4xf32, #tpu.memory_space<vmem>>, vector<128x4xf32>
    %38 = vector.extract_strided_slice %24 {offsets = [0, 12], sizes = [128, 4], strides = [1, 1]} : vector<128x16xf32> to vector<128x4xf32>
    %39 = arith.addf %37, %38 : vector<128x4xf32>
    %c3_27 = arith.constant 3 : index
    %c0_28 = arith.constant 0 : index
    %40 = vector.load %arg8[%c3_27, %c0_28] : memref<131x4xf32, #tpu.memory_space<vmem>>, vector<128x4xf32>
    tpu.vector_store %arg8[%c3_27, %c0_28], %39 {strides = array<i32>} : memref<131x4xf32, #tpu.memory_space<vmem>>, vector<128x4xf32>,
    %c0_29 = arith.constant 0 : index
    %c0_30 = arith.constant 0 : index
    %41 = vector.load %arg8[%c0_29, %c0_30] : memref<131x4xf32, #tpu.memory_space<vmem>>, vector<128x4xf32>
    %c0_31 = arith.constant 0 : index
    %c0_32 = arith.constant 0 : index
    %42 = vector.load %arg5[%c0_31, %c0_32] : memref<128x4xf32, #tpu.memory_space<vmem>>, vector<128x4xf32>
    %43 = arith.mulf %41, %42 : vector<128x4xf32>
    %c0_33 = arith.constant 0 : index
    %c0_34 = arith.constant 0 : index
    %44 = vector.load %arg6[%c0_33, %c0_34] : memref<128x4xf32, #tpu.memory_space<vmem>>, vector<128x4xf32>
    tpu.vector_store %arg6[%c0_33, %c0_34], %43 {strides = array<i32>} : memref<128x4xf32, #tpu.memory_space<vmem>>, vector<128x4xf32>,
    %c128 = arith.constant 128 : index
    %c0_35 = arith.constant 0 : index
    %45 = vector.load %arg8[%c128, %c0_35] : memref<131x4xf32, #tpu.memory_space<vmem>>, vector<3x4xf32>
    %cst_36 = arith.constant 0.000000e+00 : f32
    %46 = vector.broadcast %cst_36 : f32 to vector<131x4xf32>
    %c0_37 = arith.constant 0 : index
    %c0_38 = arith.constant 0 : index
    %47 = vector.load %arg8[%c0_37, %c0_38] : memref<131x4xf32, #tpu.memory_space<vmem>>, vector<131x4xf32>
    tpu.vector_store %arg8[%c0_37, %c0_38], %46 {strides = array<i32>} : memref<131x4xf32, #tpu.memory_space<vmem>>, vector<131x4xf32>,
    %c0_39 = arith.constant 0 : index
    %c0_40 = arith.constant 0 : index
    %48 = vector.load %arg8[%c0_39, %c0_40] : memref<131x4xf32, #tpu.memory_space<vmem>>, vector<3x4xf32>
    tpu.vector_store %arg8[%c0_39, %c0_40], %45 {strides = array<i32>} : memref<131x4xf32, #tpu.memory_space<vmem>>, vector<3x4xf32>,
    return
  }
  func.func @transform_0(%arg0: i32) -> (i32, i32) {
    %c0_i32 = arith.constant 0 : i32
    %c0_i32_0 = arith.constant 0 : i32
    return %c0_i32, %arg0 : i32, i32
  }
  func.func @transform_1(%arg0: i32) -> (i32, i32) {
    %c0_i32 = arith.constant 0 : i32
    %c0_i32_0 = arith.constant 0 : i32
    return %c0_i32, %arg0 : i32, i32
  }
  func.func @transform_2(%arg0: i32) -> (i32, i32) {
    %c0_i32 = arith.constant 0 : i32
    %c0_i32_0 = arith.constant 0 : i32
    return %c0_i32, %arg0 : i32, i32
  }
  func.func @transform_3(%arg0: i32) -> (i32, i32) {
    %c0_i32 = arith.constant 0 : i32
    %c0_i32_0 = arith.constant 0 : i32
    %c0_i32_1 = arith.constant 0 : i32
    return %c0_i32, %c0_i32_0 : i32, i32
  }
  func.func @transform_4(%arg0: i32) -> (i32, i32) {
    %c0_i32 = arith.constant 0 : i32
    %c0_i32_0 = arith.constant 0 : i32
    return %arg0, %c0_i32 : i32, i32
  }
  func.func @transform_5(%arg0: i32) -> (i32, i32) {
    %c0_i32 = arith.constant 0 : i32
    %c0_i32_0 = arith.constant 0 : i32
    return %arg0, %c0_i32 : i32, i32
  }
}

</mosaic_0001>

<llo_original>
// kernel: tpu_custom_call.1
$region0: #{tpu_custom_call.1}
  #allocation0 [shape = 'u32[]', space=smem, size = 0x4, offset = 0x4, fixed_abs, tag = 'smem constant byte address 0x4 - core index']
  #allocation1 [shape = 'u32[144,128]{1,0:T(1,128)}', space=vmem, size = 0x12000, scoped, tag = 'internal scratch']
  #allocation2 [shape = 'f32[128,128]{1,0:T(8,128)}', space=vmem, size = 0x10000, scoped, tag = 'scratch operand']
  #allocation3 [shape = 'f32[131,4]{1,0:T(8,128)}', space=vmem, size = 0x11000, scoped, tag = 'scratch operand']
  %s0 = inlined_call_operand.vmem [shape: f32[9,128], index: 0, kind: input, shape index: {}]
  %s1 = inlined_call_operand.vmem [shape: f32[9,128], index: 1, kind: input, shape index: {}]
  %s2 = inlined_call_operand.vmem [shape: f32[9,128], index: 2, kind: input, shape index: {}]
  %s3 = inlined_call_operand.vmem [shape: f32[128,16], index: 3, kind: input, shape index: {}]
  %s4 = inlined_call_operand.vmem [shape: f32[128,4], index: 4, kind: input, shape index: {}]
  %s5 = inlined_call_operand.vmem [shape: f32[128,4], index: 5, kind: output, shape index: {}]
  %s6 = sld [smem:[#allocation0]]
  $region34: #{tpu_custom_call.1} parent=0
    _
  %s8 = ssub.s32 1, %s6
  %s9 = scalar_select 0, %s8, %s6
  // Predicated region
  $region2: #{tpu_custom_call.1} parent=0 // pred_check
    _
  $region3: #{tpu_custom_call.1} parent=0 // pred_check_branch
    %11 = sbr.rel (0) target = $region5
  $region4: #{tpu_custom_call.1} parent=0 // pred_region
    _
  $region5: #{tpu_custom_call.1} parent=0 // pred_fallthru
    _
  // Predicated region
  $region6: #{tpu_custom_call.1} parent=0 // pred_check
    _
  $region7: #{tpu_custom_call.1} parent=0 // pred_check_branch
    %13 = sbr.rel (0) target = $region9
  $region8: #{tpu_custom_call.1} parent=0 // pred_region
    _
  $region9: #{tpu_custom_call.1} parent=0 // pred_fallthru
    _
  // Predicated region
  $region10: #{tpu_custom_call.1} parent=0 // pred_check
    _
  $region11: #{tpu_custom_call.1} parent=0 // pred_check_branch
    %15 = sbr.rel (0) target = $region13
  $region12: #{tpu_custom_call.1} parent=0 // pred_region
    _
  $region13: #{tpu_custom_call.1} parent=0 // pred_fallthru
    _
  // Predicated region
  $region14: #{tpu_custom_call.1} parent=0 // pred_check
    _
  $region15: #{tpu_custom_call.1} parent=0 // pred_check_branch
    %17 = sbr.rel (0) target = $region17
  $region16: #{tpu_custom_call.1} parent=0 // pred_region
    _
  $region17: #{tpu_custom_call.1} parent=0 // pred_fallthru
    _
  // Predicated region
  $region18: #{tpu_custom_call.1} parent=0 // pred_check
    _
  $region19: #{tpu_custom_call.1} parent=0 // pred_check_branch
    %19 = sbr.rel (0) target = $region21
  $region20: #{tpu_custom_call.1} parent=0 // pred_region
    _
  $region21: #{tpu_custom_call.1} parent=0 // pred_fallthru
    _
  %p20 = scmp.eq.s32.totalorder 0, 0
  // Predicated region
  $region22: #{tpu_custom_call.1} parent=0 // pred_check
    %p21 = pneg %p20
  $region23: #{tpu_custom_call.1} parent=0 // pred_check_branch
    %23 = sbr.rel (%p21) target = $region25
  $region24: #{tpu_custom_call.1} parent=0 // pred_region
    %24 = vst [vmem:[#allocation2] sm:$0xff] 0.0
    %25 = vst [vmem:[#allocation2 + $0x8] sm:$0xff] 0.0
    %26 = vst [vmem:[#allocation2 + $0x10] sm:$0xff] 0.0
    %27 = vst [vmem:[#allocation2 + $0x18] sm:$0xff] 0.0
    %28 = vst [vmem:[#allocation2 + $0x20] sm:$0xff] 0.0
    %29 = vst [vmem:[#allocation2 + $0x28] sm:$0xff] 0.0
    %30 = vst [vmem:[#allocation2 + $0x30] sm:$0xff] 0.0
    %31 = vst [vmem:[#allocation2 + $0x38] sm:$0xff] 0.0
    %32 = vst [vmem:[#allocation2 + $0x40] sm:$0xff] 0.0
    %33 = vst [vmem:[#allocation2 + $0x48] sm:$0xff] 0.0
    %34 = vst [vmem:[#allocation2 + $0x50] sm:$0xff] 0.0
    %35 = vst [vmem:[#allocation2 + $0x58] sm:$0xff] 0.0
    %36 = vst [vmem:[#allocation2 + $0x60] sm:$0xff] 0.0
    %37 = vst [vmem:[#allocation2 + $0x68] sm:$0xff] 0.0
    %38 = vst [vmem:[#allocation2 + $0x70] sm:$0xff] 0.0
    %39 = vst [vmem:[#allocation2 + $0x78] sm:$0xff] 0.0
    %vm40 = vcmask 31744
    %41 = vst.msk [vmem:[#allocation3] sm:$0xff] %vm40, 0.0
    %42 = vst.msk [vmem:[#allocation3 + $0x8] sm:$0xff] %vm40, 0.0
    %43 = vst.msk [vmem:[#allocation3 + $0x10] sm:$0xff] %vm40, 0.0
    %44 = vst.msk [vmem:[#allocation3 + $0x18] sm:$0xff] %vm40, 0.0
    %45 = vst.msk [vmem:[#allocation3 + $0x20] sm:$0xff] %vm40, 0.0
    %46 = vst.msk [vmem:[#allocation3 + $0x28] sm:$0xff] %vm40, 0.0
    %47 = vst.msk [vmem:[#allocation3 + $0x30] sm:$0xff] %vm40, 0.0
    %48 = vst.msk [vmem:[#allocation3 + $0x38] sm:$0xff] %vm40, 0.0
    %49 = vst.msk [vmem:[#allocation3 + $0x40] sm:$0xff] %vm40, 0.0
    %50 = vst.msk [vmem:[#allocation3 + $0x48] sm:$0xff] %vm40, 0.0
    %51 = vst.msk [vmem:[#allocation3 + $0x50] sm:$0xff] %vm40, 0.0
    %52 = vst.msk [vmem:[#allocation3 + $0x58] sm:$0xff] %vm40, 0.0
    %53 = vst.msk [vmem:[#allocation3 + $0x60] sm:$0xff] %vm40, 0.0
    %54 = vst.msk [vmem:[#allocation3 + $0x68] sm:$0xff] %vm40, 0.0
    %55 = vst.msk [vmem:[#allocation3 + $0x70] sm:$0xff] %vm40, 0.0
    %56 = vst.msk [vmem:[#allocation3 + $0x78] sm:$0xff] %vm40, 0.0
    %vm57 = vcmask 26624
    %58 = vst.msk [vmem:[#allocation3 + $0x80] sm:$0x7] %vm57, 0.0
  $region25: #{tpu_custom_call.1} parent=0 // pred_fallthru
    _
  %v59 = vld [vmem:[%s0] sm:$0xff]
  %v60 = vld [vmem:[%s0 + $0x8] sm:$0x1]
  %v61 = vld [vmem:[%s1] sm:$0xff]
  %v62 = vld [vmem:[%s1 + $0x8] sm:$0x1]
  %v63 = vld [vmem:[%s2] sm:$0xff]
  %v64 = vld [vmem:[%s2 + $0x8] sm:$0x1]
  %v65 = vmul.f32 %v61, %v61
  %v66 = vmul.f32 %v62, %v62
  %v67 = vmul.f32 %v63, %v63
  %v68 = vmul.f32 %v64, %v64
  %v69 = vadd.f32 %v65, %v67
  %v70 = vadd.f32 %v66, %v68
  %vm71 = vcmp.gt.f32.partialorder %v69, 0.0
  %vm72 = vcmp.gt.f32.partialorder %v70, 0.0
  %v73 = vsel %vm71, %v69, 1.0
  %v74 = vsel %vm72, %v70, 1.0
  %v75 = vrsqrt.pop %v73
  %v76 = vrsqrt.pop %v74
  %v77 = vmul.f32 %v59, %v75
  %v78 = vmul.f32 %v60, %v76
  %v79 = vmul.f32 %v61, %v77
  %v80 = vmul.f32 %v62, %v78
  %v81 = vsel %vm71, %v79, %v59
  %v82 = vsel %vm72, %v80, %v60
  %83 = vst [vmem:[#allocation2] sm:$0xff] %v81
  %84 = vst [vmem:[#allocation2 + $0x8] sm:$0x1] %v82
  %v85 = vmul.f32 %v63, %v77
  %v86 = vmul.f32 %v64, %v78
  %v87 = vsel %vm71, %v85, 0.0
  %v88 = vsel %vm72, %v86, 0.0
  %89 = vst [vmem:[#allocation2 + $0x10] sm:$0xff] %v87
  %90 = vst [vmem:[#allocation2 + $0x18] sm:$0x1] %v88
  %v91 = vld [vmem:[#allocation2] sm:$0xff]
  %v92 = vld [vmem:[#allocation2 + $0x8] sm:$0xff]
  %v93 = vld [vmem:[#allocation2 + $0x10] sm:$0xff]
  %v94 = vld [vmem:[#allocation2 + $0x18] sm:$0xff]
  %v95 = vld [vmem:[#allocation2 + $0x20] sm:$0xff]
  %v96 = vld [vmem:[#allocation2 + $0x28] sm:$0xff]
  %v97 = vld [vmem:[#allocation2 + $0x30] sm:$0xff]
  %v98 = vld [vmem:[#allocation2 + $0x38] sm:$0xff]
  %v99 = vld [vmem:[#allocation2 + $0x40] sm:$0xff]
  %v100 = vld [vmem:[#allocation2 + $0x48] sm:$0xff]
  %v101 = vld [vmem:[#allocation2 + $0x50] sm:$0xff]
  %v102 = vld [vmem:[#allocation2 + $0x58] sm:$0xff]
  %v103 = vld [vmem:[#allocation2 + $0x60] sm:$0xff]
  %v104 = vld [vmem:[#allocation2 + $0x68] sm:$0xff]
  %v105 = vld [vmem:[#allocation2 + $0x70] sm:$0xff]
  %v106 = vld [vmem:[#allocation2 + $0x78] sm:$0xff]
  %v107 = vld [vmem:[%s3] sm:$0xff]
  %v108 = vld [vmem:[%s3 + $0x8] sm:$0xff]
  %v109 = vld [vmem:[%s3 + $0x10] sm:$0xff]
  %v110 = vld [vmem:[%s3 + $0x18] sm:$0xff]
  %v111 = vld [vmem:[%s3 + $0x20] sm:$0xff]
  %v112 = vld [vmem:[%s3 + $0x28] sm:$0xff]
  %v113 = vld [vmem:[%s3 + $0x30] sm:$0xff]
  %v114 = vld [vmem:[%s3 + $0x38] sm:$0xff]
  %v115 = vld [vmem:[%s3 + $0x40] sm:$0xff]
  %v116 = vld [vmem:[%s3 + $0x48] sm:$0xff]
  %v117 = vld [vmem:[%s3 + $0x50] sm:$0xff]
  %v118 = vld [vmem:[%s3 + $0x58] sm:$0xff]
  %v119 = vld [vmem:[%s3 + $0x60] sm:$0xff]
  %v120 = vld [vmem:[%s3 + $0x68] sm:$0xff]
  %v121 = vld [vmem:[%s3 + $0x70] sm:$0xff]
  %v122 = vld [vmem:[%s3 + $0x78] sm:$0xff]
  %123 = vxpose.xlu0.b32.start [1/16] %v91, 128
  %124 = vxpose.xlu0.b32.cont [2/16] %v92, 128
  %125 = vxpose.xlu0.b32.cont [3/16] %v93, 128
  %126 = vxpose.xlu0.b32.cont [4/16] %v94, 128
  %127 = vxpose.xlu0.b32.cont [5/16] %v95, 128
  %128 = vxpose.xlu0.b32.cont [6/16] %v96, 128
  %129 = vxpose.xlu0.b32.cont [7/16] %v97, 128
  %130 = vxpose.xlu0.b32.cont [8/16] %v98, 128
  %131 = vxpose.xlu0.b32.cont [9/16] %v99, 128
  %132 = vxpose.xlu0.b32.cont [10/16] %v100, 128
  %133 = vxpose.xlu0.b32.cont [11/16] %v101, 128
  %134 = vxpose.xlu0.b32.cont [12/16] %v102, 128
  %135 = vxpose.xlu0.b32.cont [13/16] %v103, 128
  %136 = vxpose.xlu0.b32.cont [14/16] %v104, 128
  %137 = vxpose.xlu0.b32.cont [15/16] %v105, 128
  %138 = vxpose.xlu0.b32.end [16/16] %v106, 128
  %v139 = vpop.trf.xlu0
  %v140 = vpop.trf.xlu0
  %v141 = vpop.trf.xlu0
  %v142 = vpop.trf.xlu0
  %v143 = vpop.trf.xlu0
  %v144 = vpop.trf.xlu0
  %v145 = vpop.trf.xlu0
  %v146 = vpop.trf.xlu0
  %v147 = vpop.trf.xlu0
  %v148 = vpop.trf.xlu0
  %v149 = vpop.trf.xlu0
  %v150 = vpop.trf.xlu0
  %v151 = vpop.trf.xlu0
  %v152 = vpop.trf.xlu0
  %v153 = vpop.trf.xlu0
  %v154 = vpop.trf.xlu0
  %155 = vmatprep.subr.mxu0 0.0
  %156 = vmatpush1.msra.mxu0 %v107
  %157 = vmatprep.subr.mxu0 0.0
  %158 = vmatpush1.msra.mxu0 %v108
  %159 = vmatprep.subr.mxu0 0.0
  %160 = vmatpush1.msra.mxu0 %v109
  %161 = vmatprep.subr.mxu0 0.0
  %162 = vmatpush1.msra.mxu0 %v110
  %163 = vmatprep.subr.mxu0 0.0
  %164 = vmatpush1.msra.mxu0 %v111
  %165 = vmatprep.subr.mxu0 0.0
  %166 = vmatpush1.msra.mxu0 %v112
  %167 = vmatprep.subr.mxu0 0.0
  %168 = vmatpush1.msra.mxu0 %v113
  %169 = vmatprep.subr.mxu0 0.0
  %170 = vmatpush1.msra.mxu0 %v114
  %171 = vmatprep.subr.mxu0 0.0
  %172 = vmatpush1.msra.mxu0 %v115
  %173 = vmatprep.subr.mxu0 0.0
  %174 = vmatpush1.msra.mxu0 %v116
  %175 = vmatprep.subr.mxu0 0.0
  %176 = vmatpush1.msra.mxu0 %v117
  %177 = vmatprep.subr.mxu0 0.0
  %178 = vmatpush1.msra.mxu0 %v118
  %179 = vmatprep.subr.mxu0 0.0
  %180 = vmatpush1.msra.mxu0 %v119
  %181 = vmatprep.subr.mxu0 0.0
  %182 = vmatpush1.msra.mxu0 %v120
  %183 = vmatprep.subr.mxu0 0.0
  %184 = vmatpush1.msra.mxu0 %v121
  %185 = vmatprep.subr.mxu0 0.0
  %186 = vmatpush1.msra.mxu0 %v122
  %187 = vmatprep.subr.mxu0 0.0
  %188 = vmatpush1.msra.mxu0 0.0
  %189 = vmatprep.subr.mxu0 0.0
  %190 = vmatpush1.msra.mxu0 0.0
  %191 = vmatprep.subr.mxu0 0.0
  %192 = vmatpush1.msra.mxu0 0.0
  %193 = vmatprep.subr.mxu0 0.0
  %194 = vmatpush1.msra.mxu0 0.0
  %195 = vmatprep.subr.mxu0 0.0
  %196 = vmatpush1.msra.mxu0 0.0
  %197 = vmatprep.subr.mxu0 0.0
  %198 = vmatpush1.msra.mxu0 0.0
  %199 = vmatprep.subr.mxu0 0.0
  %200 = vmatpush1.msra.mxu0 0.0
  %201 = vmatprep.subr.mxu0 0.0
  %202 = vmatpush1.msra.mxu0 0.0
  %203 = vmatprep.subr.mxu0 0.0
  %204 = vmatpush1.msra.mxu0 0.0
  %205 = vmatprep.subr.mxu0 0.0
  %206 = vmatpush1.msra.mxu0 0.0
  %207 = vmatprep.subr.mxu0 0.0
  %208 = vmatpush1.msra.mxu0 0.0
  %209 = vmatprep.subr.mxu0 0.0
  %210 = vmatpush1.msra.mxu0 0.0
  %211 = vmatprep.subr.mxu0 0.0
  %212 = vmatpush1.msra.mxu0 0.0
  %213 = vmatprep.subr.mxu0 0.0
  %214 = vmatpush1.msra.mxu0 0.0
  %215 = vmatprep.subr.mxu0 0.0
  %216 = vmatpush1.msra.mxu0 0.0
  %217 = vmatprep.subr.mxu0 0.0
  %218 = vmatpush1.msra.mxu0 0.0
  %219 = vmatprep.mubr.f32.mxu0 0.0
  %220 = vmatmul.mubr.f32.gmra.mrb[0].mxu0 %v139
  %v221 = vpop.f32.mrb[0].mxu0
  %v222 = vadd.f32 0.0, %v221
  %v223 = vpop.f32.mrb[0].mxu0
  %224 = vmatprep.mubr.f32.mxu0 0.0
  %225 = vmatmul.mubr.f32.gmra.mrb[0].mxu0 %v140
  %v226 = vpop.f32.mrb[0].mxu0
  %v227 = vadd.f32 0.0, %v226
  %v228 = vpop.f32.mrb[0].mxu0
  %229 = vmatprep.mubr.f32.mxu0 0.0
  %230 = vmatmul.mubr.f32.gmra.mrb[0].mxu0 %v141
  %v231 = vpop.f32.mrb[0].mxu0
  %v232 = vadd.f32 0.0, %v231
  %v233 = vpop.f32.mrb[0].mxu0
  %234 = vmatprep.mubr.f32.mxu0 0.0
  %235 = vmatmul.mubr.f32.gmra.mrb[0].mxu0 %v142
  %v236 = vpop.f32.mrb[0].mxu0
  %v237 = vadd.f32 0.0, %v236
  %v238 = vpop.f32.mrb[0].mxu0
  %239 = vmatprep.mubr.f32.mxu0 0.0
  %240 = vmatmul.mubr.f32.gmra.mrb[0].mxu0 %v143
  %v241 = vpop.f32.mrb[0].mxu0
  %v242 = vadd.f32 0.0, %v241
  %v243 = vpop.f32.mrb[0].mxu0
  %244 = vmatprep.mubr.f32.mxu0 0.0
  %245 = vmatmul.mubr.f32.gmra.mrb[0].mxu0 %v144
  %v246 = vpop.f32.mrb[0].mxu0
  %v247 = vadd.f32 0.0, %v246
  %v248 = vpop.f32.mrb[0].mxu0
  %249 = vmatprep.mubr.f32.mxu0 0.0
  %250 = vmatmul.mubr.f32.gmra.mrb[0].mxu0 %v145
  %v251 = vpop.f32.mrb[0].mxu0
  %v252 = vadd.f32 0.0, %v251
  %v253 = vpop.f32.mrb[0].mxu0
  %254 = vmatprep.mubr.f32.mxu0 0.0
  %255 = vmatmul.mubr.f32.gmra.mrb[0].mxu0 %v146
  %v256 = vpop.f32.mrb[0].mxu0
  %v257 = vadd.f32 0.0, %v256
  %v258 = vpop.f32.mrb[0].mxu0
  %259 = vmatprep.mubr.f32.mxu0 0.0
  %260 = vmatmul.mubr.f32.gmra.mrb[0].mxu0 %v147
  %v261 = vpop.f32.mrb[0].mxu0
  %v262 = vadd.f32 0.0, %v261
  %v263 = vpop.f32.mrb[0].mxu0
  %264 = vmatprep.mubr.f32.mxu0 0.0
  %265 = vmatmul.mubr.f32.gmra.mrb[0].mxu0 %v148
  %v266 = vpop.f32.mrb[0].mxu0
  %v267 = vadd.f32 0.0, %v266
  %v268 = vpop.f32.mrb[0].mxu0
  %269 = vmatprep.mubr.f32.mxu0 0.0
  %270 = vmatmul.mubr.f32.gmra.mrb[0].mxu0 %v149
  %v271 = vpop.f32.mrb[0].mxu0
  %v272 = vadd.f32 0.0, %v271
  %v273 = vpop.f32.mrb[0].mxu0
  %274 = vmatprep.mubr.f32.mxu0 0.0
  %275 = vmatmul.mubr.f32.gmra.mrb[0].mxu0 %v150
  %v276 = vpop.f32.mrb[0].mxu0
  %v277 = vadd.f32 0.0, %v276
  %v278 = vpop.f32.mrb[0].mxu0
  %279 = vmatprep.mubr.f32.mxu0 0.0
  %280 = vmatmul.mubr.f32.gmra.mrb[0].mxu0 %v151
  %v281 = vpop.f32.mrb[0].mxu0
  %v282 = vadd.f32 0.0, %v281
  %v283 = vpop.f32.mrb[0].mxu0
  %284 = vmatprep.mubr.f32.mxu0 0.0
  %285 = vmatmul.mubr.f32.gmra.mrb[0].mxu0 %v152
  %v286 = vpop.f32.mrb[0].mxu0
  %v287 = vadd.f32 0.0, %v286
  %v288 = vpop.f32.mrb[0].mxu0
  %289 = vmatprep.mubr.f32.mxu0 0.0
  %290 = vmatmul.mubr.f32.gmra.mrb[0].mxu0 %v153
  %v291 = vpop.f32.mrb[0].mxu0
  %v292 = vadd.f32 0.0, %v291
  %v293 = vpop.f32.mrb[0].mxu0
  %294 = vmatprep.mubr.f32.mxu0 0.0
  %295 = vmatmul.mubr.f32.gmra.mrb[0].mxu0 %v154
  %v296 = vpop.f32.mrb[0].mxu0
  %v297 = vadd.f32 0.0, %v296
  %v298 = vpop.f32.mrb[0].mxu0
  %299 = vdwg.mxu0
  %v300 = vld [vmem:[#allocation3] sm:$0xff]
  %v301 = vld [vmem:[#allocation3 + $0x8] sm:$0xff]
  %v302 = vld [vmem:[#allocation3 + $0x10] sm:$0xff]
  %v303 = vld [vmem:[#allocation3 + $0x18] sm:$0xff]
  %v304 = vld [vmem:[#allocation3 + $0x20] sm:$0xff]
  %v305 = vld [vmem:[#allocation3 + $0x28] sm:$0xff]
  %v306 = vld [vmem:[#allocation3 + $0x30] sm:$0xff]
  %v307 = vld [vmem:[#allocation3 + $0x38] sm:$0xff]
  %v308 = vld [vmem:[#allocation3 + $0x40] sm:$0xff]
  %v309 = vld [vmem:[#allocation3 + $0x48] sm:$0xff]
  %v310 = vld [vmem:[#allocation3 + $0x50] sm:$0xff]
  %v311 = vld [vmem:[#allocation3 + $0x58] sm:$0xff]
  %v312 = vld [vmem:[#allocation3 + $0x60] sm:$0xff]
  %v313 = vld [vmem:[#allocation3 + $0x68] sm:$0xff]
  %v314 = vld [vmem:[#allocation3 + $0x70] sm:$0xff]
  %v315 = vld [vmem:[#allocation3 + $0x78] sm:$0xff]
  %v316 = vadd.f32 %v300, %v222
  %v317 = vadd.f32 %v301, %v227
  %v318 = vadd.f32 %v302, %v232
  %v319 = vadd.f32 %v303, %v237
  %v320 = vadd.f32 %v304, %v242
  %v321 = vadd.f32 %v305, %v247
  %v322 = vadd.f32 %v306, %v252
  %v323 = vadd.f32 %v307, %v257
  %v324 = vadd.f32 %v308, %v262
  %v325 = vadd.f32 %v309, %v267
  %v326 = vadd.f32 %v310, %v272
  %v327 = vadd.f32 %v311, %v277
  %v328 = vadd.f32 %v312, %v282
  %v329 = vadd.f32 %v313, %v287
  %v330 = vadd.f32 %v314, %v292
  %v331 = vadd.f32 %v315, %v297
  %vm332 = vcmask 31744
  %333 = vst.msk [vmem:[#allocation3] sm:$0xff] %vm332, %v316
  %334 = vst.msk [vmem:[#allocation3 + $0x8] sm:$0xff] %vm332, %v317
  %335 = vst.msk [vmem:[#allocation3 + $0x10] sm:$0xff] %vm332, %v318
  %336 = vst.msk [vmem:[#allocation3 + $0x18] sm:$0xff] %vm332, %v319
  %337 = vst.msk [vmem:[#allocation3 + $0x20] sm:$0xff] %vm332, %v320
  %338 = vst.msk [vmem:[#allocation3 + $0x28] sm:$0xff] %vm332, %v321
  %339 = vst.msk [vmem:[#allocation3 + $0x30] sm:$0xff] %vm332, %v322
  %340 = vst.msk [vmem:[#allocation3 + $0x38] sm:$0xff] %vm332, %v323
  %341 = vst.msk [vmem:[#allocation3 + $0x40] sm:$0xff] %vm332, %v324
  %342 = vst.msk [vmem:[#allocation3 + $0x48] sm:$0xff] %vm332, %v325
  %343 = vst.msk [vmem:[#allocation3 + $0x50] sm:$0xff] %vm332, %v326
  %344 = vst.msk [vmem:[#allocation3 + $0x58] sm:$0xff] %vm332, %v327
  %345 = vst.msk [vmem:[#allocation3 + $0x60] sm:$0xff] %vm332, %v328
  %346 = vst.msk [vmem:[#allocation3 + $0x68] sm:$0xff] %vm332, %v329
  %347 = vst.msk [vmem:[#allocation3 + $0x70] sm:$0xff] %vm332, %v330
  %348 = vst.msk [vmem:[#allocation3 + $0x78] sm:$0xff] %vm332, %v331
  %v349 = vld [vmem:[#allocation3 + $0x1] sm:$0xff]
  %v350 = vld [vmem:[#allocation3 + $0x9] sm:$0xff]
  %v351 = vld [vmem:[#allocation3 + $0x11] sm:$0xff]
  %v352 = vld [vmem:[#allocation3 + $0x19] sm:$0xff]
  %v353 = vld [vmem:[#allocation3 + $0x21] sm:$0xff]
  %v354 = vld [vmem:[#allocation3 + $0x29] sm:$0xff]
  %v355 = vld [vmem:[#allocation3 + $0x31] sm:$0xff]
  %v356 = vld [vmem:[#allocation3 + $0x39] sm:$0xff]
  %v357 = vld [vmem:[#allocation3 + $0x41] sm:$0xff]
  %v358 = vld [vmem:[#allocation3 + $0x49] sm:$0xff]
  %v359 = vld [vmem:[#allocation3 + $0x51] sm:$0xff]
  %v360 = vld [vmem:[#allocation3 + $0x59] sm:$0xff]
  %v361 = vld [vmem:[#allocation3 + $0x61] sm:$0xff]
  %v362 = vld [vmem:[#allocation3 + $0x69] sm:$0xff]
  %v363 = vld [vmem:[#allocation3 + $0x71] sm:$0xff]
  %v364 = vld [vmem:[#allocation3 + $0x79] sm:$0xff]
  %381 = vrot.lane.b32.xlu0 %v222, 124
  %v382 = vpop.permute.xlu0 %381
  %383 = vrot.lane.b32.xlu0 %v227, 124
  %v384 = vpop.permute.xlu0 %383
  %385 = vrot.lane.b32.xlu0 %v232, 124
  %v386 = vpop.permute.xlu0 %385
  %387 = vrot.lane.b32.xlu0 %v237, 124
  %v388 = vpop.permute.xlu0 %387
  %389 = vrot.lane.b32.xlu0 %v242, 124
  %v390 = vpop.permute.xlu0 %389
  %391 = vrot.lane.b32.xlu0 %v247, 124
  %v392 = vpop.permute.xlu0 %391
  %393 = vrot.lane.b32.xlu0 %v252, 124
  %v394 = vpop.permute.xlu0 %393
  %395 = vrot.lane.b32.xlu0 %v257, 124
  %v396 = vpop.permute.xlu0 %395
  %397 = vrot.lane.b32.xlu0 %v262, 124
  %v398 = vpop.permute.xlu0 %397
  %399 = vrot.lane.b32.xlu0 %v267, 124
  %v400 = vpop.permute.xlu0 %399
  %401 = vrot.lane.b32.xlu0 %v272, 124
  %v402 = vpop.permute.xlu0 %401
  %403 = vrot.lane.b32.xlu0 %v277, 124
  %v404 = vpop.permute.xlu0 %403
  %405 = vrot.lane.b32.xlu0 %v282, 124
  %v406 = vpop.permute.xlu0 %405
  %407 = vrot.lane.b32.xlu0 %v287, 124
  %v408 = vpop.permute.xlu0 %407
  %409 = vrot.lane.b32.xlu0 %v292, 124
  %v410 = vpop.permute.xlu0 %409
  %411 = vrot.lane.b32.xlu0 %v297, 124
  %v412 = vpop.permute.xlu0 %411
  %v429 = vadd.f32 %v349, %v382
  %v430 = vadd.f32 %v350, %v384
  %v431 = vadd.f32 %v351, %v386
  %v432 = vadd.f32 %v352, %v388
  %v433 = vadd.f32 %v353, %v390
  %v434 = vadd.f32 %v354, %v392
  %v435 = vadd.f32 %v355, %v394
  %v436 = vadd.f32 %v356, %v396
  %v437 = vadd.f32 %v357, %v398
  %v438 = vadd.f32 %v358, %v400
  %v439 = vadd.f32 %v359, %v402
  %v440 = vadd.f32 %v360, %v404
  %v441 = vadd.f32 %v361, %v406
  %v442 = vadd.f32 %v362, %v408
  %v443 = vadd.f32 %v363, %v410
  %v444 = vadd.f32 %v364, %v412
  %445 = vst.msk [vmem:[#allocation3 + $0x1] sm:$0xff] %vm332, %v429
  %446 = vst.msk [vmem:[#allocation3 + $0x9] sm:$0xff] %vm332, %v430
  %447 = vst.msk [vmem:[#allocation3 + $0x11] sm:$0xff] %vm332, %v431
  %448 = vst.msk [vmem:[#allocation3 + $0x19] sm:$0xff] %vm332, %v432
  %449 = vst.msk [vmem:[#allocation3 + $0x21] sm:$0xff] %vm332, %v433
  %450 = vst.msk [vmem:[#allocation3 + $0x29] sm:$0xff] %vm332, %v434
  %451 = vst.msk [vmem:[#allocation3 + $0x31] sm:$0xff] %vm332, %v435
  %452 = vst.msk [vmem:[#allocation3 + $0x39] sm:$0xff] %vm332, %v436
  %453 = vst.msk [vmem:[#allocation3 + $0x41] sm:$0xff] %vm332, %v437
  %454 = vst.msk [vmem:[#allocation3 + $0x49] sm:$0xff] %vm332, %v438
  %455 = vst.msk [vmem:[#allocation3 + $0x51] sm:$0xff] %vm332, %v439
  %456 = vst.msk [vmem:[#allocation3 + $0x59] sm:$0xff] %vm332, %v440
  %457 = vst.msk [vmem:[#allocation3 + $0x61] sm:$0xff] %vm332, %v441
  %458 = vst.msk [vmem:[#allocation3 + $0x69] sm:$0xff] %vm332, %v442
  %459 = vst.msk [vmem:[#allocation3 + $0x71] sm:$0xff] %vm332, %v443
  %460 = vst.msk [vmem:[#allocation3 + $0x79] sm:$0xff] %vm332, %v444
  %v461 = vld [vmem:[#allocation3 + $0x2] sm:$0xff]
  %v462 = vld [vmem:[#allocation3 + $0xa] sm:$0xff]
  %v463 = vld [vmem:[#allocation3 + $0x12] sm:$0xff]
  %v464 = vld [vmem:[#allocation3 + $0x1a] sm:$0xff]
  %v465 = vld [vmem:[#allocation3 + $0x22] sm:$0xff]
  %v466 = vld [vmem:[#allocation3 + $0x2a] sm:$0xff]
  %v467 = vld [vmem:[#allocation3 + $0x32] sm:$0xff]
  %v468 = vld [vmem:[#allocation3 + $0x3a] sm:$0xff]
  %v469 = vld [vmem:[#allocation3 + $0x42] sm:$0xff]
  %v470 = vld [vmem:[#allocation3 + $0x4a] sm:$0xff]
  %v471 = vld [vmem:[#allocation3 + $0x52] sm:$0xff]
  %v472 = vld [vmem:[#allocation3 + $0x5a] sm:$0xff]
  %v473 = vld [vmem:[#allocation3 + $0x62] sm:$0xff]
  %v474 = vld [vmem:[#allocation3 + $0x6a] sm:$0xff]
  %v475 = vld [vmem:[#allocation3 + $0x72] sm:$0xff]
  %v476 = vld [vmem:[#allocation3 + $0x7a] sm:$0xff]
  %477 = vrot.lane.b32.xlu0 %v222, 120
  %v478 = vpop.permute.xlu0 %477
  %479 = vrot.lane.b32.xlu0 %v227, 120
  %v480 = vpop.permute.xlu0 %479
  %481 = vrot.lane.b32.xlu0 %v232, 120
  %v482 = vpop.permute.xlu0 %481
  %483 = vrot.lane.b32.xlu0 %v237, 120
  %v484 = vpop.permute.xlu0 %483
  %485 = vrot.lane.b32.xlu0 %v242, 120
  %v486 = vpop.permute.xlu0 %485
  %487 = vrot.lane.b32.xlu0 %v247, 120
  %v488 = vpop.permute.xlu0 %487
  %489 = vrot.lane.b32.xlu0 %v252, 120
  %v490 = vpop.permute.xlu0 %489
  %491 = vrot.lane.b32.xlu0 %v257, 120
  %v492 = vpop.permute.xlu0 %491
  %493 = vrot.lane.b32.xlu0 %v262, 120
  %v494 = vpop.permute.xlu0 %493
  %495 = vrot.lane.b32.xlu0 %v267, 120
  %v496 = vpop.permute.xlu0 %495
  %497 = vrot.lane.b32.xlu0 %v272, 120
  %v498 = vpop.permute.xlu0 %497
  %499 = vrot.lane.b32.xlu0 %v277, 120
  %v500 = vpop.permute.xlu0 %499
  %501 = vrot.lane.b32.xlu0 %v282, 120
  %v502 = vpop.permute.xlu0 %501
  %503 = vrot.lane.b32.xlu0 %v287, 120
  %v504 = vpop.permute.xlu0 %503
  %505 = vrot.lane.b32.xlu0 %v292, 120
  %v506 = vpop.permute.xlu0 %505
  %507 = vrot.lane.b32.xlu0 %v297, 120
  %v508 = vpop.permute.xlu0 %507
  %v525 = vadd.f32 %v461, %v478
  %v526 = vadd.f32 %v462, %v480
  %v527 = vadd.f32 %v463, %v482
  %v528 = vadd.f32 %v464, %v484
  %v529 = vadd.f32 %v465, %v486
  %v530 = vadd.f32 %v466, %v488
  %v531 = vadd.f32 %v467, %v490
  %v532 = vadd.f32 %v468, %v492
  %v533 = vadd.f32 %v469, %v494
  %v534 = vadd.f32 %v470, %v496
  %v535 = vadd.f32 %v471, %v498
  %v536 = vadd.f32 %v472, %v500
  %v537 = vadd.f32 %v473, %v502
  %v538 = vadd.f32 %v474, %v504
  %v539 = vadd.f32 %v475, %v506
  %v540 = vadd.f32 %v476, %v508
  %541 = vst.msk [vmem:[#allocation3 + $0x2] sm:$0xff] %vm332, %v525
  %542 = vst.msk [vmem:[#allocation3 + $0xa] sm:$0xff] %vm332, %v526
  %543 = vst.msk [vmem:[#allocation3 + $0x12] sm:$0xff] %vm332, %v527
  %544 = vst.msk [vmem:[#allocation3 + $0x1a] sm:$0xff] %vm332, %v528
  %545 = vst.msk [vmem:[#allocation3 + $0x22] sm:$0xff] %vm332, %v529
  %546 = vst.msk [vmem:[#allocation3 + $0x2a] sm:$0xff] %vm332, %v530
  %547 = vst.msk [vmem:[#allocation3 + $0x32] sm:$0xff] %vm332, %v531
  %548 = vst.msk [vmem:[#allocation3 + $0x3a] sm:$0xff] %vm332, %v532
  %549 = vst.msk [vmem:[#allocation3 + $0x42] sm:$0xff] %vm332, %v533
  %550 = vst.msk [vmem:[#allocation3 + $0x4a] sm:$0xff] %vm332, %v534
  %551 = vst.msk [vmem:[#allocation3 + $0x52] sm:$0xff] %vm332, %v535
  %552 = vst.msk [vmem:[#allocation3 + $0x5a] sm:$0xff] %vm332, %v536
  %553 = vst.msk [vmem:[#allocation3 + $0x62] sm:$0xff] %vm332, %v537
  %554 = vst.msk [vmem:[#allocation3 + $0x6a] sm:$0xff] %vm332, %v538
  %555 = vst.msk [vmem:[#allocation3 + $0x72] sm:$0xff] %vm332, %v539
  %556 = vst.msk [vmem:[#allocation3 + $0x7a] sm:$0xff] %vm332, %v540
  %v557 = vld [vmem:[#allocation3 + $0x3] sm:$0xff]
  %v558 = vld [vmem:[#allocation3 + $0xb] sm:$0xff]
  %v559 = vld [vmem:[#allocation3 + $0x13] sm:$0xff]
  %v560 = vld [vmem:[#allocation3 + $0x1b] sm:$0xff]
  %v561 = vld [vmem:[#allocation3 + $0x23] sm:$0xff]
  %v562 = vld [vmem:[#allocation3 + $0x2b] sm:$0xff]
  %v563 = vld [vmem:[#allocation3 + $0x33] sm:$0xff]
  %v564 = vld [vmem:[#allocation3 + $0x3b] sm:$0xff]
  %v565 = vld [vmem:[#allocation3 + $0x43] sm:$0xff]
  %v566 = vld [vmem:[#allocation3 + $0x4b] sm:$0xff]
  %v567 = vld [vmem:[#allocation3 + $0x53] sm:$0xff]
  %v568 = vld [vmem:[#allocation3 + $0x5b] sm:$0xff]
  %v569 = vld [vmem:[#allocation3 + $0x63] sm:$0xff]
  %v570 = vld [vmem:[#allocation3 + $0x6b] sm:$0xff]
  %v571 = vld [vmem:[#allocation3 + $0x73] sm:$0xff]
  %v572 = vld [vmem:[#allocation3 + $0x7b] sm:$0xff]
  %573 = vrot.lane.b32.xlu0 %v222, 116
  %v574 = vpop.permute.xlu0 %573
  %575 = vrot.lane.b32.xlu0 %v227, 116
  %v576 = vpop.permute.xlu0 %575
  %577 = vrot.lane.b32.xlu0 %v232, 116
  %v578 = vpop.permute.xlu0 %577
  %579 = vrot.lane.b32.xlu0 %v237, 116
  %v580 = vpop.permute.xlu0 %579
  %581 = vrot.lane.b32.xlu0 %v242, 116
  %v582 = vpop.permute.xlu0 %581
  %583 = vrot.lane.b32.xlu0 %v247, 116
  %v584 = vpop.permute.xlu0 %583
  %585 = vrot.lane.b32.xlu0 %v252, 116
  %v586 = vpop.permute.xlu0 %585
  %587 = vrot.lane.b32.xlu0 %v257, 116
  %v588 = vpop.permute.xlu0 %587
  %589 = vrot.lane.b32.xlu0 %v262, 116
  %v590 = vpop.permute.xlu0 %589
  %591 = vrot.lane.b32.xlu0 %v267, 116
  %v592 = vpop.permute.xlu0 %591
  %593 = vrot.lane.b32.xlu0 %v272, 116
  %v594 = vpop.permute.xlu0 %593
  %595 = vrot.lane.b32.xlu0 %v277, 116
  %v596 = vpop.permute.xlu0 %595
  %597 = vrot.lane.b32.xlu0 %v282, 116
  %v598 = vpop.permute.xlu0 %597
  %599 = vrot.lane.b32.xlu0 %v287, 116
  %v600 = vpop.permute.xlu0 %599
  %601 = vrot.lane.b32.xlu0 %v292, 116
  %v602 = vpop.permute.xlu0 %601
  %603 = vrot.lane.b32.xlu0 %v297, 116
  %v604 = vpop.permute.xlu0 %603
  %v621 = vadd.f32 %v557, %v574
  %v622 = vadd.f32 %v558, %v576
  %v623 = vadd.f32 %v559, %v578
  %v624 = vadd.f32 %v560, %v580
  %v625 = vadd.f32 %v561, %v582
  %v626 = vadd.f32 %v562, %v584
  %v627 = vadd.f32 %v563, %v586
  %v628 = vadd.f32 %v564, %v588
  %v629 = vadd.f32 %v565, %v590
  %v630 = vadd.f32 %v566, %v592
  %v631 = vadd.f32 %v567, %v594
  %v632 = vadd.f32 %v568, %v596
  %v633 = vadd.f32 %v569, %v598
  %v634 = vadd.f32 %v570, %v600
  %v635 = vadd.f32 %v571, %v602
  %v636 = vadd.f32 %v572, %v604
  %637 = vst.msk [vmem:[#allocation3 + $0x3] sm:$0xff] %vm332, %v621
  %638 = vst.msk [vmem:[#allocation3 + $0xb] sm:$0xff] %vm332, %v622
  %639 = vst.msk [vmem:[#allocation3 + $0x13] sm:$0xff] %vm332, %v623
  %640 = vst.msk [vmem:[#allocation3 + $0x1b] sm:$0xff] %vm332, %v624
  %641 = vst.msk [vmem:[#allocation3 + $0x23] sm:$0xff] %vm332, %v625
  %642 = vst.msk [vmem:[#allocation3 + $0x2b] sm:$0xff] %vm332, %v626
  %643 = vst.msk [vmem:[#allocation3 + $0x33] sm:$0xff] %vm332, %v627
  %644 = vst.msk [vmem:[#allocation3 + $0x3b] sm:$0xff] %vm332, %v628
  %645 = vst.msk [vmem:[#allocation3 + $0x43] sm:$0xff] %vm332, %v629
  %646 = vst.msk [vmem:[#allocation3 + $0x4b] sm:$0xff] %vm332, %v630
  %647 = vst.msk [vmem:[#allocation3 + $0x53] sm:$0xff] %vm332, %v631
  %648 = vst.msk [vmem:[#allocation3 + $0x5b] sm:$0xff] %vm332, %v632
  %649 = vst.msk [vmem:[#allocation3 + $0x63] sm:$0xff] %vm332, %v633
  %650 = vst.msk [vmem:[#allocation3 + $0x6b] sm:$0xff] %vm332, %v634
  %651 = vst.msk [vmem:[#allocation3 + $0x73] sm:$0xff] %vm332, %v635
  %652 = vst.msk [vmem:[#allocation3 + $0x7b] sm:$0xff] %vm332, %v636
  %v653 = vld [vmem:[#allocation3] sm:$0xff]
  %v654 = vld [vmem:[#allocation3 + $0x8] sm:$0xff]
  %v655 = vld [vmem:[#allocation3 + $0x10] sm:$0xff]
  %v656 = vld [vmem:[#allocation3 + $0x18] sm:$0xff]
  %v657 = vld [vmem:[#allocation3 + $0x20] sm:$0xff]
  %v658 = vld [vmem:[#allocation3 + $0x28] sm:$0xff]
  %v659 = vld [vmem:[#allocation3 + $0x30] sm:$0xff]
  %v660 = vld [vmem:[#allocation3 + $0x38] sm:$0xff]
  %v661 = vld [vmem:[#allocation3 + $0x40] sm:$0xff]
  %v662 = vld [vmem:[#allocation3 + $0x48] sm:$0xff]
  %v663 = vld [vmem:[#allocation3 + $0x50] sm:$0xff]
  %v664 = vld [vmem:[#allocation3 + $0x58] sm:$0xff]
  %v665 = vld [vmem:[#allocation3 + $0x60] sm:$0xff]
  %v666 = vld [vmem:[#allocation3 + $0x68] sm:$0xff]
  %v667 = vld [vmem:[#allocation3 + $0x70] sm:$0xff]
  %v668 = vld [vmem:[#allocation3 + $0x78] sm:$0xff]
  %v669 = vld [vmem:[%s4] sm:$0xff]
  %v670 = vld [vmem:[%s4 + $0x8] sm:$0xff]
  %v671 = vld [vmem:[%s4 + $0x10] sm:$0xff]
  %v672 = vld [vmem:[%s4 + $0x18] sm:$0xff]
  %v673 = vld [vmem:[%s4 + $0x20] sm:$0xff]
  %v674 = vld [vmem:[%s4 + $0x28] sm:$0xff]
  %v675 = vld [vmem:[%s4 + $0x30] sm:$0xff]
  %v676 = vld [vmem:[%s4 + $0x38] sm:$0xff]
  %v677 = vld [vmem:[%s4 + $0x40] sm:$0xff]
  %v678 = vld [vmem:[%s4 + $0x48] sm:$0xff]
  %v679 = vld [vmem:[%s4 + $0x50] sm:$0xff]
  %v680 = vld [vmem:[%s4 + $0x58] sm:$0xff]
  %v681 = vld [vmem:[%s4 + $0x60] sm:$0xff]
  %v682 = vld [vmem:[%s4 + $0x68] sm:$0xff]
  %v683 = vld [vmem:[%s4 + $0x70] sm:$0xff]
  %v684 = vld [vmem:[%s4 + $0x78] sm:$0xff]
  %v685 = vmul.f32 %v653, %v669
  %v686 = vmul.f32 %v654, %v670
  %v687 = vmul.f32 %v655, %v671
  %v688 = vmul.f32 %v656, %v672
  %v689 = vmul.f32 %v657, %v673
  %v690 = vmul.f32 %v658, %v674
  %v691 = vmul.f32 %v659, %v675
  %v692 = vmul.f32 %v660, %v676
  %v693 = vmul.f32 %v661, %v677
  %v694 = vmul.f32 %v662, %v678
  %v695 = vmul.f32 %v663, %v679
  %v696 = vmul.f32 %v664, %v680
  %v697 = vmul.f32 %v665, %v681
  %v698 = vmul.f32 %v666, %v682
  %v699 = vmul.f32 %v667, %v683
  %v700 = vmul.f32 %v668, %v684
  %701 = vst.msk [vmem:[%s5] sm:$0xff] %vm332, %v685
  %702 = vst.msk [vmem:[%s5 + $0x8] sm:$0xff] %vm332, %v686
  %703 = vst.msk [vmem:[%s5 + $0x10] sm:$0xff] %vm332, %v687
  %704 = vst.msk [vmem:[%s5 + $0x18] sm:$0xff] %vm332, %v688
  %705 = vst.msk [vmem:[%s5 + $0x20] sm:$0xff] %vm332, %v689
  %706 = vst.msk [vmem:[%s5 + $0x28] sm:$0xff] %vm332, %v690
  %707 = vst.msk [vmem:[%s5 + $0x30] sm:$0xff] %vm332, %v691
  %708 = vst.msk [vmem:[%s5 + $0x38] sm:$0xff] %vm332, %v692
  %709 = vst.msk [vmem:[%s5 + $0x40] sm:$0xff] %vm332, %v693
  %710 = vst.msk [vmem:[%s5 + $0x48] sm:$0xff] %vm332, %v694
  %711 = vst.msk [vmem:[%s5 + $0x50] sm:$0xff] %vm332, %v695
  %712 = vst.msk [vmem:[%s5 + $0x58] sm:$0xff] %vm332, %v696
  %713 = vst.msk [vmem:[%s5 + $0x60] sm:$0xff] %vm332, %v697
  %714 = vst.msk [vmem:[%s5 + $0x68] sm:$0xff] %vm332, %v698
  %715 = vst.msk [vmem:[%s5 + $0x70] sm:$0xff] %vm332, %v699
  %716 = vst.msk [vmem:[%s5 + $0x78] sm:$0xff] %vm332, %v700
  %v717 = vld [vmem:[#allocation3 + $0x80] sm:$0x7]
  %718 = vst.msk [vmem:[#allocation3] sm:$0xff] %vm332, 0.0
  %719 = vst.msk [vmem:[#allocation3 + $0x8] sm:$0xff] %vm332, 0.0
  %720 = vst.msk [vmem:[#allocation3 + $0x10] sm:$0xff] %vm332, 0.0
  %721 = vst.msk [vmem:[#allocation3 + $0x18] sm:$0xff] %vm332, 0.0
  %722 = vst.msk [vmem:[#allocation3 + $0x20] sm:$0xff] %vm332, 0.0
  %723 = vst.msk [vmem:[#allocation3 + $0x28] sm:$0xff] %vm332, 0.0
  %724 = vst.msk [vmem:[#allocation3 + $0x30] sm:$0xff] %vm332, 0.0
  %725 = vst.msk [vmem:[#allocation3 + $0x38] sm:$0xff] %vm332, 0.0
  %726 = vst.msk [vmem:[#allocation3 + $0x40] sm:$0xff] %vm332, 0.0
  %727 = vst.msk [vmem:[#allocation3 + $0x48] sm:$0xff] %vm332, 0.0
  %728 = vst.msk [vmem:[#allocation3 + $0x50] sm:$0xff] %vm332, 0.0
  %729 = vst.msk [vmem:[#allocation3 + $0x58] sm:$0xff] %vm332, 0.0
  %730 = vst.msk [vmem:[#allocation3 + $0x60] sm:$0xff] %vm332, 0.0
  %731 = vst.msk [vmem:[#allocation3 + $0x68] sm:$0xff] %vm332, 0.0
  %732 = vst.msk [vmem:[#allocation3 + $0x70] sm:$0xff] %vm332, 0.0
  %733 = vst.msk [vmem:[#allocation3 + $0x78] sm:$0xff] %vm332, 0.0
  %vm734 = vcmask 26624
  %735 = vst.msk [vmem:[#allocation3 + $0x80] sm:$0x7] %vm734, 0.0
  %736 = vst.msk [vmem:[#allocation3] sm:$0x7] %vm734, %v717
  // Predicated region
  $region26: #{tpu_custom_call.1} parent=0 // pred_check
    _
  $region27: #{tpu_custom_call.1} parent=0 // pred_check_branch
    %738 = sbr.rel (0) target = $region29
  $region28: #{tpu_custom_call.1} parent=0 // pred_region
    _
  $region29: #{tpu_custom_call.1} parent=0 // pred_fallthru
    _
  // Predicated region
  $region30: #{tpu_custom_call.1} parent=0 // pred_check
    _
  $region31: #{tpu_custom_call.1} parent=0 // pred_check_branch
    %740 = sbr.rel (0) target = $region33
  $region32: #{tpu_custom_call.1} parent=0 // pred_region
    _
  $region33: #{tpu_custom_call.1} parent=0 // pred_fallthru
    _

</llo_original>
